<compile_context>
chip_gen: v7x
topology: tpu7x:2x2x1
jax: 0.10.0
libtpu: 0.0.40
codegen_flags: <defaults>
</compile_context>

<pallas_src>
import jax
import jax.numpy as jnp
from jax.experimental import pallas as pl
from jax.experimental.pallas import tpu as pltpu


def _pool_linear_kernel(x_ref, w_ref, o_ref):
    # x_ref: (tile_n, HW, C)   w_ref: (C, num_class)   o_ref: (tile_n, num_class)
    x = x_ref[...].astype(jnp.float32)
    # AdaptiveAvgPool2d(1): the 1/(H*W) scale is pre-folded into w_ref, so a
    # plain spatial sum is sufficient here.
    pooled = jnp.sum(x, axis=1)                              # (tile_n, C)
    out = jnp.dot(pooled, w_ref[...], preferred_element_type=jnp.float32)
    o_ref[...] = out.astype(o_ref.dtype)


def _choose_tile_n(n, hw, c, itemsize):
    """Sublane-aligned batch tile sized so each (double-buffered) x block stays
    around <= 8 MiB per buffer -- safe under scoped VMEM on v5e/v6e/v7x."""
    per_row_bytes = hw * c * itemsize
    tile = max(1, (8 * 1024 * 1024) // per_row_bytes)
    tile = min(tile, 512)             # amortize ~0.35us/step without huge blocks
    if n <= tile:
        return n                      # single full-extent block over the batch
    return max(8, (tile // 8) * 8)    # multiple of 8 (sublane) for clean tiling


def linear_classifier(x, weight):
    """x: (N, C, H, W) NCHW; weight: (num_class, C) as torch.nn.Linear stores it."""
    N, C, H, W = x.shape
    num_class, in_c = weight.shape
    assert in_c == C, "weight in_features must match channel dim"
    HW = H * W

    # Lane-dense glue: channels-last so C rides the 128-lane axis.
    # TODO(synk): if the upstream feature extractor can emit NHWC directly,
    # drop this transpose (it is the only non-fused HBM shuffle here).
    x_nhwc = jnp.transpose(x, (0, 2, 3, 1)).reshape(N, HW, C)

    # Fold AdaptiveAvgPool's 1/(H*W) into the tiny (C, num_class) weight (host-side).
    w_t = weight.T.astype(jnp.float32) * jnp.float32(1.0 / HW)

    itemsize = jnp.dtype(x.dtype).itemsize
    tile_n = _choose_tile_n(N, HW, C, itemsize)
    grid = (pl.cdiv(N, tile_n),)

    cost = pl.CostEstimate(
        flops=2 * N * C * num_class + N * HW * C,            # matmul + pooling adds
        transcendentals=0,
        bytes_accessed=(N * HW * C * itemsize                # x read (dominant)
                        + C * num_class * 4                  # weight read
                        + N * num_class * itemsize),         # output write
    )

    return pl.pallas_call(
        _pool_linear_kernel,
        out_shape=jax.ShapeDtypeStruct((N, num_class), x.dtype),
        grid=grid,
        in_specs=[
            pl.BlockSpec((tile_n, HW, C), lambda i: (i, 0, 0)),
            pl.BlockSpec((C, num_class), lambda i: (0, 0)),  # grid-invariant weight
        ],
        out_specs=pl.BlockSpec((tile_n, num_class), lambda i: (i, 0)),
        compiler_params=pltpu.CompilerParams(
            dimension_semantics=("parallel",),               # shard batch on v7x's 2 TCs
            vmem_limit_bytes=48 * 1024 * 1024,               # headroom on 64 MiB v7x VMEM
        ),
        cost_estimate=cost,
    )(x_nhwc, w_t)


if __name__ == "__main__":
    # Small shapes consistent with module defaults: in_channel=128, num_class=6.
    N, C, H, W = 2, 128, 8, 8
    NUM_CLASS = 6

    key = jax.random.PRNGKey(0)
    kx, kw = jax.random.split(key)
    x = jax.random.normal(kx, (N, C, H, W), dtype=jnp.float32)
    # torch.nn.Linear stores weight as (out_features, in_features)
    weight = jax.random.normal(kw, (NUM_CLASS, C), dtype=jnp.float32) * 0.05

    out = jax.block_until_ready(linear_classifier(x, weight))

    # Pure-JAX reference: mean-pool then x @ W^T
    ref = jnp.mean(x, axis=(2, 3)) @ weight.T
    assert out.shape == (N, NUM_CLASS)
    assert jnp.allclose(out, ref, atol=1e-4, rtol=1e-4), "mismatch vs reference"

    print("KERNEL_OK")
</pallas_src>

<mosaic_0001>
module attributes {stable_mosaic.version = 11 : i64} {
  func.func @_pool_linear_kernel(%arg0: i32, %arg1: memref<2x64x128xf32, #tpu.memory_space<vmem>>, %arg2: memref<128x6xf32, #tpu.memory_space<vmem>>, %arg3: memref<2x6xf32, #tpu.memory_space<vmem>>) attributes {dimension_semantics = [#tpu.dimension_semantics<parallel>], iteration_bounds = array<i64: 1>, scalar_prefetch = 0 : i64, scratch_operands = 0 : i64, tpu.core_type = #tpu.core_type<tc>, window_params = [{transform_indices = @transform_0, window_bounds = array<i64: 2, 64, 128>}, {pipeline_mode = #tpu.pipeline_mode<synchronous>, transform_indices = @transform_1, window_bounds = array<i64: 128, 6>}, {transform_indices = @transform_2, window_bounds = array<i64: 2, 6>}]} {
    %c0 = arith.constant 0 : index
    %c0_0 = arith.constant 0 : index
    %c0_1 = arith.constant 0 : index
    %0 = vector.load %arg1[%c0, %c0_0, %c0_1] : memref<2x64x128xf32, #tpu.memory_space<vmem>>, vector<2x64x128xf32>
    %cst = arith.constant dense<0.000000e+00> : vector<2x128xf32>
    %1 = vector.multi_reduction <add>, %0, %cst [1] : vector<2x64x128xf32> to vector<2x128xf32>
    %c0_2 = arith.constant 0 : index
    %c0_3 = arith.constant 0 : index
    %2 = vector.load %arg2[%c0_2, %c0_3] : memref<128x6xf32, #tpu.memory_space<vmem>>, vector<128x6xf32>
    %cst_4 = arith.constant dense<0.000000e+00> : vector<2x6xf32>
    %3 = tpu.matmul %1, %2, %cst_4 {dimension_numbers = #tpu.dot_dimension_numbers<[1], [0], [0], [1], [0, 0, 1, 1], [], []>} : vector<2x128xf32>, vector<128x6xf32>, vector<2x6xf32> -> vector<2x6xf32>
    %c0_5 = arith.constant 0 : index
    %c0_6 = arith.constant 0 : index
    %4 = vector.load %arg3[%c0_5, %c0_6] : memref<2x6xf32, #tpu.memory_space<vmem>>, vector<2x6xf32>
    tpu.vector_store %arg3[%c0_5, %c0_6], %3 {strides = array<i32>} : memref<2x6xf32, #tpu.memory_space<vmem>>, vector<2x6xf32>,
    return
  }
  func.func @transform_0(%arg0: i32) -> (i32, i32, i32) {
    %c0_i32 = arith.constant 0 : i32
    %c0_i32_0 = arith.constant 0 : i32
    %c0_i32_1 = arith.constant 0 : i32
    return %arg0, %c0_i32, %c0_i32_0 : i32, i32, i32
  }
  func.func @transform_1(%arg0: i32) -> (i32, i32) {
    %c0_i32 = arith.constant 0 : i32
    %c0_i32_0 = arith.constant 0 : i32
    %c0_i32_1 = arith.constant 0 : i32
    return %c0_i32, %c0_i32_0 : i32, i32
  }
  func.func @transform_2(%arg0: i32) -> (i32, i32) {
    %c0_i32 = arith.constant 0 : i32
    %c0_i32_0 = arith.constant 0 : i32
    return %arg0, %c0_i32 : i32, i32
  }
}

</mosaic_0001>

<llo_original>
// kernel: tpu_custom_call.1
$region0: #{tpu_custom_call.1}
  #allocation0 [shape = 'u32[]', space=smem, size = 0x4, offset = 0x4, fixed_abs, tag = 'smem constant byte address 0x4 - core index']
  #allocation1 [shape = 'u32[144,128]{1,0:T(1,128)}', space=vmem, size = 0x12000, scoped, tag = 'internal scratch']
  %s0 = inlined_call_operand.vmem [shape: f32[2,64,128], index: 0, kind: input, shape index: {}]
  %s1 = inlined_call_operand.vmem [shape: f32[128,6], index: 1, kind: input, shape index: {}]
  %s2 = inlined_call_operand.hbm [shape: f32[2,6], index: 2, kind: output, shape index: {}]
  %s3 = sld [smem:[#allocation0]]
  $region18: #{tpu_custom_call.1} parent=0
    _
  %s5 = ssub.s32 1, %s3
  %s6 = scalar_select 0, %s5, %s3
  $region1: #{tpu_custom_call.1} parent=0
    #allocation2 [shape = 'u8[1024]{0}', space=vmem, size = 0x400, scoped, tag = 'output window, operand 0, single buffered']
    #allocation3 [shape = 's32[1]{0}', space=sflag, size = 0x4, scoped, tag = 'scoped memory for tpu_custom_call.1']
    %7 = vsyncpa [#allocation3], 0
    // Predicated region
    $region2: #{tpu_custom_call.1} parent=1 // pred_check
      _
    $region3: #{tpu_custom_call.1} parent=1 // pred_check_branch
      %9 = sbr.rel (0) target = $region5
    $region4: #{tpu_custom_call.1} parent=1 // pred_region
      _
    $region5: #{tpu_custom_call.1} parent=1 // pred_fallthru
      _
    // Predicated region
    $region6: #{tpu_custom_call.1} parent=1 // pred_check
      _
    $region7: #{tpu_custom_call.1} parent=1 // pred_check_branch
      %11 = sbr.rel (0) target = $region9
    $region8: #{tpu_custom_call.1} parent=1 // pred_region
      _
    $region9: #{tpu_custom_call.1} parent=1 // pred_fallthru
      _
    %v12 = vld [vmem:[%s0] sm:$0xff]
    %v13 = vld [vmem:[%s0 + $0x8] sm:$0xff]
    %v14 = vld [vmem:[%s0 + $0x10] sm:$0xff]
    %v15 = vld [vmem:[%s0 + $0x18] sm:$0xff]
    %v16 = vld [vmem:[%s0 + $0x20] sm:$0xff]
    %v17 = vld [vmem:[%s0 + $0x28] sm:$0xff]
    %v18 = vld [vmem:[%s0 + $0x30] sm:$0xff]
    %v19 = vld [vmem:[%s0 + $0x38] sm:$0xff]
    %v20 = vld [vmem:[%s0 + $0x40] sm:$0xff]
    %v21 = vld [vmem:[%s0 + $0x48] sm:$0xff]
    %v22 = vld [vmem:[%s0 + $0x50] sm:$0xff]
    %v23 = vld [vmem:[%s0 + $0x58] sm:$0xff]
    %v24 = vld [vmem:[%s0 + $0x60] sm:$0xff]
    %v25 = vld [vmem:[%s0 + $0x68] sm:$0xff]
    %v26 = vld [vmem:[%s0 + $0x70] sm:$0xff]
    %v27 = vld [vmem:[%s0 + $0x78] sm:$0xff]
    %v28 = vadd.f32 %v12, %v13
    %v29 = vadd.f32 %v28, %v14
    %v30 = vadd.f32 %v29, %v15
    %v31 = vadd.f32 %v30, %v16
    %v32 = vadd.f32 %v31, %v17
    %v33 = vadd.f32 %v32, %v18
    %v34 = vadd.f32 %v33, %v19
    %v35 = vrot.slane %v34, 4
    %v36 = vadd.f32 %v34, %v35
    %v37 = vrot.slane %v36, 2
    %v38 = vadd.f32 %v36, %v37
    %v39 = vrot.slane %v38, 1
    %v40 = vadd.f32 %v38, %v39
    %v41 = vadd.f32 %v20, %v21
    %v42 = vadd.f32 %v41, %v22
    %v43 = vadd.f32 %v42, %v23
    %v44 = vadd.f32 %v43, %v24
    %v45 = vadd.f32 %v44, %v25
    %v46 = vadd.f32 %v45, %v26
    %v47 = vadd.f32 %v46, %v27
    %v48 = vrot.slane %v47, 4
    %v49 = vadd.f32 %v47, %v48
    %v50 = vrot.slane %v49, 2
    %v51 = vadd.f32 %v49, %v50
    %v52 = vrot.slane %v51, 1
    %v53 = vadd.f32 %v51, %v52
    %v54 = vld [vmem:[%s1] sm:$0xff]
    %v55 = vld [vmem:[%s1 + $0x8] sm:$0xff]
    %v56 = vld [vmem:[%s1 + $0x10] sm:$0xff]
    %v57 = vld [vmem:[%s1 + $0x18] sm:$0xff]
    %v58 = vld [vmem:[%s1 + $0x20] sm:$0xff]
    %v59 = vld [vmem:[%s1 + $0x28] sm:$0xff]
    %v60 = vld [vmem:[%s1 + $0x30] sm:$0xff]
    %v61 = vld [vmem:[%s1 + $0x38] sm:$0xff]
    %v62 = vld [vmem:[%s1 + $0x40] sm:$0xff]
    %v63 = vld [vmem:[%s1 + $0x48] sm:$0xff]
    %v64 = vld [vmem:[%s1 + $0x50] sm:$0xff]
    %v65 = vld [vmem:[%s1 + $0x58] sm:$0xff]
    %v66 = vld [vmem:[%s1 + $0x60] sm:$0xff]
    %v67 = vld [vmem:[%s1 + $0x68] sm:$0xff]
    %v68 = vld [vmem:[%s1 + $0x70] sm:$0xff]
    %v69 = vld [vmem:[%s1 + $0x78] sm:$0xff]
    %vm72 = vcmask 1041409
    %v73 = vsel %vm72, %v53, %v40
    %75 = vmatprep.subr.mxu0 0.0
    %76 = vmatpush1.msra.mxu0 %v54
    %77 = vmatprep.subr.mxu0 0.0
    %78 = vmatpush1.msra.mxu0 %v55
    %79 = vmatprep.subr.mxu0 0.0
    %80 = vmatpush1.msra.mxu0 %v56
    %81 = vmatprep.subr.mxu0 0.0
    %82 = vmatpush1.msra.mxu0 %v57
    %83 = vmatprep.subr.mxu0 0.0
    %84 = vmatpush1.msra.mxu0 %v58
    %85 = vmatprep.subr.mxu0 0.0
    %86 = vmatpush1.msra.mxu0 %v59
    %87 = vmatprep.subr.mxu0 0.0
    %88 = vmatpush1.msra.mxu0 %v60
    %89 = vmatprep.subr.mxu0 0.0
    %90 = vmatpush1.msra.mxu0 %v61
    %91 = vmatprep.subr.mxu0 0.0
    %92 = vmatpush1.msra.mxu0 %v62
    %93 = vmatprep.subr.mxu0 0.0
    %94 = vmatpush1.msra.mxu0 %v63
    %95 = vmatprep.subr.mxu0 0.0
    %96 = vmatpush1.msra.mxu0 %v64
    %97 = vmatprep.subr.mxu0 0.0
    %98 = vmatpush1.msra.mxu0 %v65
    %99 = vmatprep.subr.mxu0 0.0
    %100 = vmatpush1.msra.mxu0 %v66
    %101 = vmatprep.subr.mxu0 0.0
    %102 = vmatpush1.msra.mxu0 %v67
    %103 = vmatprep.subr.mxu0 0.0
    %104 = vmatpush1.msra.mxu0 %v68
    %105 = vmatprep.subr.mxu0 0.0
    %106 = vmatpush1.msra.mxu0 %v69
    %107 = vmatprep.subr.mxu0 0.0
    %108 = vmatpush1.msra.mxu0 0.0
    %109 = vmatprep.subr.mxu0 0.0
    %110 = vmatpush1.msra.mxu0 0.0
    %111 = vmatprep.subr.mxu0 0.0
    %112 = vmatpush1.msra.mxu0 0.0
    %113 = vmatprep.subr.mxu0 0.0
    %114 = vmatpush1.msra.mxu0 0.0
    %115 = vmatprep.subr.mxu0 0.0
    %116 = vmatpush1.msra.mxu0 0.0
    %117 = vmatprep.subr.mxu0 0.0
    %118 = vmatpush1.msra.mxu0 0.0
    %119 = vmatprep.subr.mxu0 0.0
    %120 = vmatpush1.msra.mxu0 0.0
    %121 = vmatprep.subr.mxu0 0.0
    %122 = vmatpush1.msra.mxu0 0.0
    %123 = vmatprep.subr.mxu0 0.0
    %124 = vmatpush1.msra.mxu0 0.0
    %125 = vmatprep.subr.mxu0 0.0
    %126 = vmatpush1.msra.mxu0 0.0
    %127 = vmatprep.subr.mxu0 0.0
    %128 = vmatpush1.msra.mxu0 0.0
    %129 = vmatprep.subr.mxu0 0.0
    %130 = vmatpush1.msra.mxu0 0.0
    %131 = vmatprep.subr.mxu0 0.0
    %132 = vmatpush1.msra.mxu0 0.0
    %133 = vmatprep.subr.mxu0 0.0
    %134 = vmatpush1.msra.mxu0 0.0
    %135 = vmatprep.subr.mxu0 0.0
    %136 = vmatpush1.msra.mxu0 0.0
    %137 = vmatprep.subr.mxu0 0.0
    %138 = vmatpush1.msra.mxu0 0.0
    %139 = vmatprep.mubr.f32.mxu0 0.0
    %140 = vmatmul.mubr.f32.gmra.mrb[0].mxu0 %v73
    %v141 = vpop.f32.mrb[0].mxu0
    %v142 = vadd.f32 0.0, %v141
    %v143 = vpop.f32.mrb[0].mxu0
    %144 = vdwg.mxu0
    %vm145 = vcmask 41984
    %146 = vst.msk [vmem:[#allocation2] sm:$0x3] %vm145, %v142
    // Predicated region
    $region10: #{tpu_custom_call.1} parent=1 // pred_check
      _
    $region11: #{tpu_custom_call.1} parent=1 // pred_check_branch
      %148 = sbr.rel (0) target = $region13
    $region12: #{tpu_custom_call.1} parent=1 // pred_region
      %s150 = ssub.s32 32, 32
      %151 = vsyncadd [#allocation3], %s150
      %s153 = sshll.u32 [#allocation2], 4
      %s154 = int_to_ptr.vmem [resolvable:$true] %s153
      %156 = dma.vmem_to_hbm [thread:$0]  %s154, 32, %s2, [#allocation3]
    $region13: #{tpu_custom_call.1} parent=1 // pred_fallthru
      _
    // Predicated region
    $region14: #{tpu_custom_call.1} parent=1 // pred_check
      _
    $region15: #{tpu_custom_call.1} parent=1 // pred_check_branch
      %158 = sbr.rel (0) target = $region17
    $region16: #{tpu_custom_call.1} parent=1 // pred_region
      %159 = dma.done [#allocation3], 32
    $region17: #{tpu_custom_call.1} parent=1 // pred_fallthru
      _
    %160 = vsyncpa [#allocation3], 1

</llo_original>
